<compile_context>
chip_gen: v6e
topology: v6e:2x2x1
jax: 0.10.0
libtpu: 0.0.40
codegen_flags: <defaults>
</compile_context>

<pallas_src>
import functools
import math

import jax
import jax.numpy as jnp
from jax.experimental import pallas as pl
from jax.experimental.pallas import tpu as pltpu

LANES = 128
# Pad granularity: 16 sublanes * 128 lanes keeps `rows` a multiple of 16 so the
# same blocks work for f32 (8,128) and bf16 (16,128) sublane packing.
ALIGN = 16 * LANES


def _tpu_config():
    """Return (num_tensorcores, max_tile_rows, vmem_limit_bytes) for this chip."""
    kind = ""
    try:
        dev = jax.devices()[0]
        if dev.platform == "tpu":
            kind = dev.device_kind.lower()
    except Exception:
        pass
    # Chips where one JAX device owns two TensorCores (megacore-style).
    multi_core = any(tag in kind for tag in ("v4", "v5p", "v7", "tpu7"))
    num_cores = 2 if multi_core else 1
    if ("v5e" in kind) or ("v5 lite" in kind) or ("v5lite" in kind):
        # v5e: lowest HBM bandwidth, 128 MiB physical VMEM -> bigger blocks
        # amortize the ~0.35us/grid-step overhead; raise the scoped limit.
        return num_cores, 4096, 64 * 1024 * 1024
    # v6e / v7x / default: ~1 MiB f32 block per input per buffer fits the
    # 32 MiB scoped VMEM (safe on v7x's 64 MiB physical VMEM too).
    return num_cores, 2048, 32 * 1024 * 1024


_NUM_TC, _MAX_TILE_ROWS, _VMEM_LIMIT = _tpu_config()


def _focal_loss_kernel(pred_ref, gt_ref, loss_ref, cnt_ref, *,
                       rows, tile_rows, acc_rows, blocks_per_core, needs_mask):
    i = pl.program_id(1)

    # Resident (1, acc_rows, 128) accumulators across the inner ("arbitrary")
    # axis; zero them on the first step of each core's slice.
    @pl.when(i == 0)
    def _():
        loss_ref[...] = jnp.zeros_like(loss_ref)
        cnt_ref[...] = jnp.zeros_like(cnt_ref)

    pred = pred_ref[...].astype(jnp.float32)
    gt = gt_ref[...].astype(jnp.float32)
    groups = tile_rows // acc_rows

    def accumulate(p, g):
        is_pos = g == 1.0
        is_neg = g < 1.0
        one_m_p = 1.0 - p
        one_m_g = 1.0 - g
        w2 = one_m_g * one_m_g
        neg_w = w2 * w2                                   # (1 - gt)^4
        pos_term = jnp.log(p) * one_m_p * one_m_p
        neg_term = jnp.log(one_m_p) * p * p * neg_w       # log(1 - pred), reused sub
        # pos / neg indicator sets are disjoint; anything else (masked gt=2) -> 0.
        # Selects discard the non-finite values of the unselected branch.
        loss = jnp.where(is_pos, pos_term, jnp.where(is_neg, neg_term, 0.0))
        cnt = is_pos.astype(jnp.float32)
        # Reduce only along tile rows into the wide resident accumulator
        # (pure VPU adds, shallow dependence chain); the final cross-lane /
        # cross-sublane sum happens once in the wrapper on a tiny slab.
        loss_ref[0] += loss.reshape(groups, acc_rows, LANES).sum(axis=0)
        cnt_ref[0] += cnt.reshape(groups, acc_rows, LANES).sum(axis=0)

    if needs_mask:
        # Zero padding inside `rows` already contributes exactly 0, so only the
        # row-aligned region past `rows` (partial edge block or a duplicated
        # block) must be neutralized -- and only on that block.
        b = pl.program_id(0) * blocks_per_core + i        # logical block index
        is_edge = (b + 1) * tile_rows > rows
        not_edge = (b + 1) * tile_rows <= rows

        @pl.when(is_edge)
        def _():
            row = jax.lax.broadcasted_iota(jnp.int32, (tile_rows, LANES), 0)
            valid = (b * tile_rows + row) < rows
            # pred=0.5 keeps logs finite, gt=2.0 zeroes both indicator sets.
            accumulate(jnp.where(valid, pred, 0.5),
                       jnp.where(valid, gt, 2.0))

        @pl.when(not_edge)
        def _():
            accumulate(pred, gt)
    else:
        accumulate(pred, gt)


@jax.jit
def focal_loss(pred, gt):
    """Pallas equivalent of FocalLoss()(pred, gt) for NCHW inputs."""
    assert pred.shape == gt.shape
    n = int(pred.size)                      # static at trace time

    # Keep the native dtype: bf16 heatmaps stream at half the HBM bytes; the
    # cast to f32 happens in-register inside the kernel.
    pred_f = pred.reshape(-1)
    gt_f = gt.reshape(-1)

    n_pad = -(-n // ALIGN) * ALIGN
    pad = n_pad - n
    if pad:  # static guard; zero padding is loss-neutral (contributes exactly 0)
        pred_f = jnp.pad(pred_f, (0, pad))
        gt_f = jnp.pad(gt_f, (0, pad))

    rows = n_pad // LANES                   # multiple of 16
    tile_rows = min(_MAX_TILE_ROWS, rows)   # multiple of 16
    num_blocks = -(-rows // tile_rows)
    num_cores = _NUM_TC if num_blocks >= _NUM_TC else 1
    bpc = -(-num_blocks // num_cores)       # blocks per core
    acc_rows = math.gcd(tile_rows, 64)      # wide resident accumulator rows
    # Mask is needed only when some grid slot reads past the padded row count
    # (partial edge block or duplicated block); the boundary is row-aligned.
    needs_mask = num_cores * bpc * tile_rows > rows

    pred_2d = pred_f.reshape(rows, LANES)
    gt_2d = gt_f.reshape(rows, LANES)

    if num_cores * bpc > num_blocks:
        # Extra grid slots re-read the last block; their contribution is fully
        # zeroed by the in-kernel row mask (logical row >= rows).
        def tile_index(c, i):
            return (jnp.minimum(c * bpc + i, num_blocks - 1), 0)
    else:
        def tile_index(c, i):
            return (c * bpc + i, 0)

    tile_spec = pl.BlockSpec((tile_rows, LANES), tile_index)
    acc_shape = jax.ShapeDtypeStruct((num_cores, acc_rows, LANES), jnp.float32)
    acc_spec = pl.BlockSpec((1, acc_rows, LANES), lambda c, i: (c, 0, 0))

    kernel = functools.partial(
        _focal_loss_kernel, rows=rows, tile_rows=tile_rows, acc_rows=acc_rows,
        blocks_per_core=bpc, needs_mask=needs_mask)

    # Only CORE_PARALLEL actually shards the leading axis across TensorCores
    # (v4/v5p/v7x); on single-TC chips the axis has size 1 and stays arbitrary.
    lead_sem = (getattr(pltpu, "CORE_PARALLEL", pltpu.PARALLEL)
                if num_cores > 1 else pltpu.ARBITRARY)

    loss_acc, cnt_acc = pl.pallas_call(
        kernel,
        out_shape=(acc_shape, acc_shape),
        grid_spec=pltpu.PrefetchScalarGridSpec(
            num_scalar_prefetch=0,
            grid=(num_cores, bpc),
            in_specs=[tile_spec, tile_spec],
            out_specs=(acc_spec, acc_spec),
        ),
        compiler_params=pltpu.CompilerParams(
            dimension_semantics=(lead_sem, pltpu.ARBITRARY),
            vmem_limit_bytes=_VMEM_LIMIT,
        ),
    )(pred_2d, gt_2d)

    loss_sum = jnp.sum(loss_acc)
    num_pos = jnp.sum(cnt_acc)
    # pos_sum is exactly 0 when num_pos == 0, so the PyTorch `if num_pos == 0`
    # branch collapses into a single expression with identical semantics.
    return -loss_sum / jnp.maximum(num_pos, 1.0)


def _focal_loss_ref(pred, gt):
    """Pure-JAX reference mirroring the PyTorch _neg_loss exactly."""
    pred = pred.astype(jnp.float32)
    gt = gt.astype(jnp.float32)
    pos_inds = (gt == 1.0).astype(jnp.float32)
    neg_inds = (gt < 1.0).astype(jnp.float32)
    neg_weights = (1.0 - gt) ** 4
    pos_loss = jnp.sum(jnp.log(pred) * (1.0 - pred) ** 2 * pos_inds)
    neg_loss = jnp.sum(jnp.log(1.0 - pred) * pred ** 2 * neg_weights * neg_inds)
    num_pos = jnp.sum(pos_inds)
    return jnp.where(
        num_pos == 0.0,
        -neg_loss,
        -(pos_loss + neg_loss) / jnp.maximum(num_pos, 1.0),
    )


def _make_inputs(key, shape):
    k1, k2, k3 = jax.random.split(key, 3)
    # pred: sigmoid-like heatmap in (0, 1)
    pred = jax.nn.sigmoid(jax.random.normal(k1, shape, jnp.float32))
    # gt: CenterNet-style gaussian heatmap in [0, 1] with a few exact 1.0 peaks
    gt = jax.random.uniform(k2, shape, jnp.float32) * 0.99
    peak = jax.random.uniform(k3, shape) < 0.02
    gt = jnp.where(peak, 1.0, gt)
    return pred, gt


if __name__ == "__main__":
    key = jax.random.PRNGKey(0)

    shapes = [
        (2, 4, 16, 16),     # NCHW as in the module: aligned, single block, no mask
        (2, 4, 20, 24),     # unaligned -> loss-neutral zero pad, no mask needed
        (2, 4, 150, 256),   # multi-block, partial edge block -> gated row mask
        (2, 8, 192, 256),   # multi-block, partial edge block
    ]

    for shape in shapes:
        key, sub = jax.random.split(key)
        pred, gt = _make_inputs(sub, shape)
        loss = focal_loss(pred, gt)
        jax.block_until_ready(loss)
        ref = _focal_loss_ref(pred, gt)
        assert jnp.allclose(loss, ref, rtol=1e-4, atol=1e-5), (shape, loss, ref)

    print("KERNEL_OK")
</pallas_src>

<mosaic_0001>
module attributes {stable_mosaic.version = 11 : i64} {
  func.func @_focal_loss_kernel(%arg0: i32, %arg1: i32, %arg2: memref<16x128xf32, #tpu.memory_space<vmem>>, %arg3: memref<16x128xf32, #tpu.memory_space<vmem>>, %arg4: memref<1x16x128xf32, #tpu.memory_space<vmem>>, %arg5: memref<1x16x128xf32, #tpu.memory_space<vmem>>) attributes {dimension_semantics = [#tpu.dimension_semantics<arbitrary>, #tpu.dimension_semantics<arbitrary>], iteration_bounds = array<i64: 1, 1>, scalar_prefetch = 0 : i64, scratch_operands = 0 : i64, tpu.core_type = #tpu.core_type<tc>, window_params = [{transform_indices = @transform_0, window_bounds = array<i64: 16, 128>}, {transform_indices = @transform_1, window_bounds = array<i64: 16, 128>}, {transform_indices = @transform_2, window_bounds = array<i64: 1, 16, 128>}, {transform_indices = @transform_3, window_bounds = array<i64: 1, 16, 128>}]} {
    %c0_i32 = arith.constant 0 : i32
    %0 = arith.cmpi eq, %arg1, %c0_i32 : i32
    %1 = arith.extui %0 : i1 to i32
    %c0_i32_0 = arith.constant 0 : i32
    %2 = arith.cmpi ne, %1, %c0_i32_0 : i32
    scf.if %2 {
      %cst_22 = arith.constant 0.000000e+00 : f32
      %43 = vector.broadcast %cst_22 : f32 to vector<1x16x128xf32>
      %c0_23 = arith.constant 0 : index
      %c0_24 = arith.constant 0 : index
      %c0_25 = arith.constant 0 : index
      %44 = vector.load %arg4[%c0_23, %c0_24, %c0_25] : memref<1x16x128xf32, #tpu.memory_space<vmem>>, vector<1x16x128xf32>
      tpu.vector_store %arg4[%c0_23, %c0_24, %c0_25], %43 {strides = array<i32>} : memref<1x16x128xf32, #tpu.memory_space<vmem>>, vector<1x16x128xf32>,
      %cst_26 = arith.constant 0.000000e+00 : f32
      %45 = vector.broadcast %cst_26 : f32 to vector<1x16x128xf32>
      %c0_27 = arith.constant 0 : index
      %c0_28 = arith.constant 0 : index
      %c0_29 = arith.constant 0 : index
      %46 = vector.load %arg5[%c0_27, %c0_28, %c0_29] : memref<1x16x128xf32, #tpu.memory_space<vmem>>, vector<1x16x128xf32>
      tpu.vector_store %arg5[%c0_27, %c0_28, %c0_29], %45 {strides = array<i32>} : memref<1x16x128xf32, #tpu.memory_space<vmem>>, vector<1x16x128xf32>,
    } else {
    }
    %c0 = arith.constant 0 : index
    %c0_1 = arith.constant 0 : index
    %3 = vector.load %arg2[%c0, %c0_1] : memref<16x128xf32, #tpu.memory_space<vmem>>, vector<16x128xf32>
    %c0_2 = arith.constant 0 : index
    %c0_3 = arith.constant 0 : index
    %4 = vector.load %arg3[%c0_2, %c0_3] : memref<16x128xf32, #tpu.memory_space<vmem>>, vector<16x128xf32>
    %cst = arith.constant 1.000000e+00 : f32
    %5 = vector.broadcast %cst : f32 to vector<16x128xf32>
    %6 = arith.cmpf oeq, %4, %5 : vector<16x128xf32>
    %cst_4 = arith.constant 1.000000e+00 : f32
    %7 = vector.broadcast %cst_4 : f32 to vector<16x128xf32>
    %8 = arith.cmpf olt, %4, %7 : vector<16x128xf32>
    %cst_5 = arith.constant 1.000000e+00 : f32
    %9 = vector.broadcast %cst_5 : f32 to vector<16x128xf32>
    %10 = arith.subf %9, %3 : vector<16x128xf32>
    %cst_6 = arith.constant 1.000000e+00 : f32
    %11 = vector.broadcast %cst_6 : f32 to vector<16x128xf32>
    %12 = arith.subf %11, %4 : vector<16x128xf32>
    %13 = arith.mulf %12, %12 : vector<16x128xf32>
    %14 = arith.mulf %13, %13 : vector<16x128xf32>
    %15 = math.log %3 : vector<16x128xf32>
    %16 = arith.mulf %15, %10 : vector<16x128xf32>
    %17 = arith.mulf %16, %10 : vector<16x128xf32>
    %18 = math.log %10 : vector<16x128xf32>
    %19 = arith.mulf %18, %3 : vector<16x128xf32>
    %20 = arith.mulf %19, %3 : vector<16x128xf32>
    %21 = arith.mulf %20, %14 : vector<16x128xf32>
    %cst_7 = arith.constant 0.000000e+00 : f32
    %22 = vector.broadcast %cst_7 : f32 to vector<16x128xf32>
    %23 = arith.select %8, %21, %22 : vector<16x128xi1>, vector<16x128xf32>
    %24 = arith.select %6, %17, %23 : vector<16x128xi1>, vector<16x128xf32>
    %25 = arith.extui %6 : vector<16x128xi1> to vector<16x128xi32>
    %26 = arith.sitofp %25 : vector<16x128xi32> to vector<16x128xf32>
    %c0_8 = arith.constant 0 : index
    %c0_9 = arith.constant 0 : index
    %c0_10 = arith.constant 0 : index
    %27 = vector.load %arg4[%c0_8, %c0_9, %c0_10] : memref<1x16x128xf32, #tpu.memory_space<vmem>>, vector<1x16x128xf32>
    %28 = vector.shape_cast %27 : vector<1x16x128xf32> to vector<16x128xf32>
    %29 = vector.shape_cast %24 : vector<16x128xf32> to vector<1x16x128xf32>
    %cst_11 = arith.constant dense<0.000000e+00> : vector<16x128xf32>
    %30 = vector.multi_reduction <add>, %29, %cst_11 [0] : vector<1x16x128xf32> to vector<16x128xf32>
    %31 = arith.addf %28, %30 : vector<16x128xf32>
    %c0_12 = arith.constant 0 : index
    %c0_13 = arith.constant 0 : index
    %c0_14 = arith.constant 0 : index
    %32 = vector.load %arg4[%c0_12, %c0_13, %c0_14] : memref<1x16x128xf32, #tpu.memory_space<vmem>>, vector<1x16x128xf32>
    %33 = vector.shape_cast %32 : vector<1x16x128xf32> to vector<16x128xf32>
    %34 = vector.shape_cast %31 : vector<16x128xf32> to vector<1x16x128xf32>
    tpu.vector_store %arg4[%c0_12, %c0_13, %c0_14], %34 {strides = array<i32>} : memref<1x16x128xf32, #tpu.memory_space<vmem>>, vector<1x16x128xf32>,
    %c0_15 = arith.constant 0 : index
    %c0_16 = arith.constant 0 : index
    %c0_17 = arith.constant 0 : index
    %35 = vector.load %arg5[%c0_15, %c0_16, %c0_17] : memref<1x16x128xf32, #tpu.memory_space<vmem>>, vector<1x16x128xf32>
    %36 = vector.shape_cast %35 : vector<1x16x128xf32> to vector<16x128xf32>
    %37 = vector.shape_cast %26 : vector<16x128xf32> to vector<1x16x128xf32>
    %cst_18 = arith.constant dense<0.000000e+00> : vector<16x128xf32>
    %38 = vector.multi_reduction <add>, %37, %cst_18 [0] : vector<1x16x128xf32> to vector<16x128xf32>
    %39 = arith.addf %36, %38 : vector<16x128xf32>
    %c0_19 = arith.constant 0 : index
    %c0_20 = arith.constant 0 : index
    %c0_21 = arith.constant 0 : index
    %40 = vector.load %arg5[%c0_19, %c0_20, %c0_21] : memref<1x16x128xf32, #tpu.memory_space<vmem>>, vector<1x16x128xf32>
    %41 = vector.shape_cast %40 : vector<1x16x128xf32> to vector<16x128xf32>
    %42 = vector.shape_cast %39 : vector<16x128xf32> to vector<1x16x128xf32>
    tpu.vector_store %arg5[%c0_19, %c0_20, %c0_21], %42 {strides = array<i32>} : memref<1x16x128xf32, #tpu.memory_space<vmem>>, vector<1x16x128xf32>,
    return
  }
  func.func @transform_0(%arg0: i32, %arg1: i32) -> (i32, i32) {
    %c1_i32 = arith.constant 1 : i32
    %0 = arith.muli %arg0, %c1_i32 : i32
    %1 = arith.addi %0, %arg1 : i32
    %c0_i32 = arith.constant 0 : i32
    %c0_i32_0 = arith.constant 0 : i32
    return %1, %c0_i32 : i32, i32
  }
  func.func @transform_1(%arg0: i32, %arg1: i32) -> (i32, i32) {
    %c1_i32 = arith.constant 1 : i32
    %0 = arith.muli %arg0, %c1_i32 : i32
    %1 = arith.addi %0, %arg1 : i32
    %c0_i32 = arith.constant 0 : i32
    %c0_i32_0 = arith.constant 0 : i32
    return %1, %c0_i32 : i32, i32
  }
  func.func @transform_2(%arg0: i32, %arg1: i32) -> (i32, i32, i32) {
    %c0_i32 = arith.constant 0 : i32
    %c0_i32_0 = arith.constant 0 : i32
    %c0_i32_1 = arith.constant 0 : i32
    return %arg0, %c0_i32, %c0_i32_0 : i32, i32, i32
  }
  func.func @transform_3(%arg0: i32, %arg1: i32) -> (i32, i32, i32) {
    %c0_i32 = arith.constant 0 : i32
    %c0_i32_0 = arith.constant 0 : i32
    %c0_i32_1 = arith.constant 0 : i32
    return %arg0, %c0_i32, %c0_i32_0 : i32, i32, i32
  }
}

</mosaic_0001>

<llo_original>
// kernel: focal_loss.1
$region0: #{focal_loss.1}
  #allocation0 [shape = 'u32[]', space=smem, size = 0x4, offset = 0x4, fixed_abs, tag = 'smem constant byte address 0x4 - core index']
  #allocation1 [shape = 'u32[144,128]{1,0:T(1,128)}', space=vmem, size = 0x12000, scoped, tag = 'internal scratch']
  %s0 = inlined_call_operand.vmem [shape: f32[16,128], index: 0, kind: input, shape index: {}]
  %s1 = inlined_call_operand.vmem [shape: f32[16,128], index: 1, kind: input, shape index: {}]
  %s2 = inlined_call_operand.vmem [shape: f32[1,16,128], index: 2, kind: output, shape index: {0}]
  %s3 = inlined_call_operand.vmem [shape: f32[1,16,128], index: 3, kind: output, shape index: {1}]
  %4 = xla_tuple %s2, %s3
  %s5 = sld [smem:[#allocation0]]
  $region30: #{focal_loss.1} parent=0
    _
  %s7 = ssub.s32 1, %s5
  %s8 = scalar_select 0, %s7, %s5
  // Predicated region
  $region2: #{focal_loss.1} parent=0 // pred_check
    _
  $region3: #{focal_loss.1} parent=0 // pred_check_branch
    %10 = sbr.rel (0) target = $region5
  $region4: #{focal_loss.1} parent=0 // pred_region
    %s11 = sadd.s32 0, 0
    %s12 = smul.u32 2, %s11
    %p13 = scmp.lt.s32.totalorder %s12, 1
    %s14 = scalar_select %p13, %s12, 1
    %s15 = smul.addr %s14, 8
    %s16 = scalar_lea.vmem %s0, %s15
    %s17 = sadd.s32 0, 0
    %s18 = smul.u32 2, %s17
  $region5: #{focal_loss.1} parent=0 // pred_fallthru
    _
  // Predicated region
  $region6: #{focal_loss.1} parent=0 // pred_check
    _
  $region7: #{focal_loss.1} parent=0 // pred_check_branch
    %20 = sbr.rel (0) target = $region9
  $region8: #{focal_loss.1} parent=0 // pred_region
    %s21 = sadd.s32 0, 0
    %s22 = smul.u32 2, %s21
    %p23 = scmp.lt.s32.totalorder %s22, 1
    %s24 = scalar_select %p23, %s22, 1
    %s25 = smul.addr %s24, 8
    %s26 = scalar_lea.vmem %s1, %s25
    %s27 = sadd.s32 0, 0
    %s28 = smul.u32 2, %s27
  $region9: #{focal_loss.1} parent=0 // pred_fallthru
    _
  %s29 = sadd.s32 0, 0
  %s30 = smul.u32 2, %s29
  %p31 = scmp.lt.s32.totalorder %s30, 1
  %s32 = scalar_select %p31, %s30, 1
  %s33 = smul.addr %s32, 8
  %s34 = scalar_lea.vmem %s0, %s33
  %s35 = sadd.s32 0, 0
  %s36 = smul.u32 2, %s35
  %p37 = scmp.lt.s32.totalorder %s36, 1
  %s38 = scalar_select %p37, %s36, 1
  %s39 = smul.addr %s38, 8
  %s40 = scalar_lea.vmem %s1, %s39
  %s41 = sadd.s32 0, 0
  %s42 = smul.u32 2, %s41
  %p43 = scmp.lt.s32.totalorder %s42, 1
  %s44 = scalar_select %p43, %s42, 1
  %s45 = smul.addr %s44, 8
  %s46 = scalar_lea.vmem %s0, %s45
  %s47 = sadd.s32 0, 0
  %s48 = smul.u32 2, %s47
  %s49 = sadd.s32 0, 0
  %s50 = smul.u32 2, %s49
  %p51 = scmp.lt.s32.totalorder %s50, 1
  %s52 = scalar_select %p51, %s50, 1
  %s53 = smul.addr %s52, 8
  %s54 = scalar_lea.vmem %s1, %s53
  %s55 = sadd.s32 0, 0
  %s56 = smul.u32 2, %s55
  %p57 = scmp.eq.s32.totalorder 0, 0
  // Predicated region
  $region10: #{focal_loss.1} parent=0 // pred_check
    %p58 = pneg %p57
  $region11: #{focal_loss.1} parent=0 // pred_check_branch
    %60 = sbr.rel (%p58) target = $region13
  $region12: #{focal_loss.1} parent=0 // pred_region
    %61 = vst [vmem:[%s2] sm:$0xff] 0.0
    %62 = vst [vmem:[%s2 + $0x8] sm:$0xff] 0.0
    %63 = vst [vmem:[%s3] sm:$0xff] 0.0
    %64 = vst [vmem:[%s3 + $0x8] sm:$0xff] 0.0
  $region13: #{focal_loss.1} parent=0 // pred_fallthru
    _
  %v65 = vld [vmem:[%s46] sm:$0xff]
  %v66 = vld [vmem:[%s46 + $0x8] sm:$0xff]
  %v67 = vld [vmem:[%s54] sm:$0xff]
  %v68 = vld [vmem:[%s54 + $0x8] sm:$0xff]
  %vm69 = vcmp.eq.f32.partialorder %v67, 1.0
  %vm70 = vcmp.eq.f32.partialorder %v68, 1.0
  %vm71 = vcmp.lt.f32.partialorder %v67, 1.0
  %vm72 = vcmp.lt.f32.partialorder %v68, 1.0
  %v73 = vsub.f32 1.0, %v65
  %v74 = vsub.f32 1.0, %v66
  %v75 = vsub.f32 1.0, %v67
  %v76 = vsub.f32 1.0, %v68
  %v77 = vmul.f32 %v75, %v75
  %v78 = vmul.f32 %v76, %v76
  %v79 = vmul.f32 %v77, %v77
  %v80 = vmul.f32 %v78, %v78
  %v81 = vlog2.pop %v65
  %v82 = vmul.f32 %v81, 0.6931472
  %v83 = vlog2.pop %v66
  %v84 = vmul.f32 %v83, 0.6931472
  %v85 = vmul.f32 %v82, %v73
  %v86 = vmul.f32 %v84, %v74
  %v87 = vmul.f32 %v85, %v73
  %v88 = vmul.f32 %v86, %v74
  %v89 = vlog2.pop %v73
  %v90 = vmul.f32 %v89, 0.6931472
  %v91 = vlog2.pop %v74
  %v92 = vmul.f32 %v91, 0.6931472
  %v93 = vmul.f32 %v90, %v65
  %v94 = vmul.f32 %v92, %v66
  %v95 = vmul.f32 %v93, %v65
  %v96 = vmul.f32 %v94, %v66
  %v97 = vmul.f32 %v95, %v79
  %v98 = vmul.f32 %v96, %v80
  %v99 = vsel %vm71, %v97, 0.0
  %v100 = vsel %vm72, %v98, 0.0
  %v101 = vsel %vm69, %v87, %v99
  %v102 = vsel %vm70, %v88, %v100
  %v103 = vsel %vm69, 1, 0
  %v104 = vsel %vm70, 1, 0
  %v105 = vcvt.s32.f32 %v103
  %v106 = vcvt.s32.f32 %v104
  %v107 = vld [vmem:[%s2] sm:$0xff]
  %v108 = vld [vmem:[%s2 + $0x8] sm:$0xff]
  %v109 = vadd.f32 %v101, 0.0
  %v110 = vadd.f32 %v102, 0.0
  %v111 = vadd.f32 %v107, %v109
  %v112 = vadd.f32 %v108, %v110
  %113 = vst [vmem:[%s2] sm:$0xff] %v111
  %114 = vst [vmem:[%s2 + $0x8] sm:$0xff] %v112
  %v115 = vld [vmem:[%s3] sm:$0xff]
  %v116 = vld [vmem:[%s3 + $0x8] sm:$0xff]
  %v117 = vadd.f32 %v105, 0.0
  %v118 = vadd.f32 %v106, 0.0
  %v119 = vadd.f32 %v115, %v117
  %v120 = vadd.f32 %v116, %v118
  %121 = vst [vmem:[%s3] sm:$0xff] %v119
  %122 = vst [vmem:[%s3 + $0x8] sm:$0xff] %v120
  // Predicated region
  $region14: #{focal_loss.1} parent=0 // pred_check
    _
  $region15: #{focal_loss.1} parent=0 // pred_check_branch
    %124 = sbr.rel (0) target = $region17
  $region16: #{focal_loss.1} parent=0 // pred_region
    _
  $region17: #{focal_loss.1} parent=0 // pred_fallthru
    _
  // Predicated region
  $region18: #{focal_loss.1} parent=0 // pred_check
    _
  $region19: #{focal_loss.1} parent=0 // pred_check_branch
    %126 = sbr.rel (0) target = $region21
  $region20: #{focal_loss.1} parent=0 // pred_region
    _
  $region21: #{focal_loss.1} parent=0 // pred_fallthru
    _
  // Predicated region
  $region22: #{focal_loss.1} parent=0 // pred_check
    _
  $region23: #{focal_loss.1} parent=0 // pred_check_branch
    %128 = sbr.rel (0) target = $region25
  $region24: #{focal_loss.1} parent=0 // pred_region
    _
  $region25: #{focal_loss.1} parent=0 // pred_fallthru
    _
  // Predicated region
  $region26: #{focal_loss.1} parent=0 // pred_check
    _
  $region27: #{focal_loss.1} parent=0 // pred_check_branch
    %130 = sbr.rel (0) target = $region29
  $region28: #{focal_loss.1} parent=0 // pred_region
    _
  $region29: #{focal_loss.1} parent=0 // pred_fallthru
    _

</llo_original>
